<compile_context>
chip_gen: v5e
topology: v5e:2x2
jax: 0.10.0
libtpu: 0.0.40
codegen_flags: <defaults>
</compile_context>

<pallas_src>
import functools

import jax
import jax.numpy as jnp
import numpy as np
from jax.experimental import pallas as pl
from jax.experimental.pallas import tpu as pltpu


# ----------------------------------------------------------------------------
# Fused kernel: conv1 (3x3, pad=1) + bias + ReLU + MaxPool2d(2,2), TN images/step
# ----------------------------------------------------------------------------
def _fused_conv_relu_pool_kernel(x_ref, w_ref, b_ref, sel_ref, o_ref, xpad_ref, *,
                                 H, W, Cin, Cout, KH, KW, TN):
    # x_ref:    (TN, Cin, H*W)     bf16  unpadded images, spatial dims flattened
    # w_ref:    (Cout, KH*KW*Cin)  bf16  conv weight, columns ordered (kh, kw, ci)
    # b_ref:    (Cout, 1)          f32
    # sel_ref:  (Lm, P)            bf16  hoisted 0/1 pool-compaction matrix
    # o_ref:    (1, TN*Cout, P)    f32   pooled outputs, image-major on sublanes
    # xpad_ref: (Cin, Hpad*Wpad)   f32   scratch: zero-padded image built in-kernel
    Wpad = W + 2
    Hp, Wp = H // 2, W // 2
    P = Hp * Wp
    L = (H - 1) * Wpad + W                      # width of the "wide" conv output
    Lm = L - 1 - Wpad

    wv = w_ref[...]                             # (Cout, KH*KW*Cin) bf16
    bias = b_ref[...]                           # (Cout, 1) f32
    sel = sel_ref[...]                          # (Lm, P) bf16

    # Zero the padded scratch every step (cheap; only pad columns actually need it,
    # interiors are fully overwritten per image below).
    xpad_ref[...] = jnp.zeros_like(xpad_ref)

    for i in range(TN):
        # ---- fold Conv2d padding=1 into the kernel: copy interior rows ----
        for h in range(H):
            dst = (h + 1) * Wpad + 1
            xpad_ref[:, dst:dst + W] = (
                x_ref[i, :, h * W:(h + 1) * W].astype(jnp.float32))

        xs = xpad_ref[...].astype(jnp.bfloat16)                 # (Cin, Hpad*Wpad)

        # ---- conv1 as 9 shifted (Cout,Cin)@(Cin,L) MXU matmuls, f32 accumulation.
        # (At Cin=3 the in-VMEM im2col copy needed to fuse to K=27 costs about as
        #  much as the extra MXU pushes it saves; kept as 9 accumulated matmuls.)
        acc = jnp.zeros((Cout, L), jnp.float32)
        for kh in range(KH):
            for kw in range(KW):
                t = kh * KW + kw
                start = kh * Wpad + kw
                slab = xs[:, start:start + L]                   # (Cin, L) contiguous
                wk = wv[:, t * Cin:(t + 1) * Cin]               # (Cout, Cin)
                acc = acc + jnp.dot(wk, slab,
                                    preferred_element_type=jnp.float32)

        # ---- bias + ReLU (valid outputs live at columns h*Wpad + w, w < W) ----
        acc = jnp.maximum(acc + bias, 0.0)

        # ---- fused 2x2 stride-2 max-pool ----
        # pairwise max along W (adjacent columns), then along H (columns Wpad apart),
        # then compact the stride-2 window origins with the hoisted 0/1 matmul.
        m1 = jnp.maximum(acc[:, :L - 1], acc[:, 1:])            # (Cout, L-1)
        m2 = jnp.maximum(m1[:, :Lm], m1[:, Wpad:])              # (Cout, Lm)
        pooled = jnp.dot(m2.astype(jnp.bfloat16), sel,
                         preferred_element_type=jnp.float32)    # (Cout, P)

        o_ref[0, i * Cout:(i + 1) * Cout, :] = pooled


# ----------------------------------------------------------------------------
# Batch-block picker: >= 2 parallel grid steps (v7x dual TC), then fattest block
# ----------------------------------------------------------------------------
def _pick_images_per_block(n):
    best = 1
    for cand in range(1, min(8, n) + 1):
        if n % cand == 0 and n // cand >= 2:
            best = cand
    return best


# ----------------------------------------------------------------------------
# Forward pass wrapper
# ----------------------------------------------------------------------------
@jax.jit
def net_forward(x_nchw, conv_w, conv_b):
    """x_nchw: (N, 3, H, W) f32 -> (N, 8, H//2, W//2) f32 (NCHW)."""
    N, Cin, H, W = x_nchw.shape
    Cout, Cin_w, KH, KW = conv_w.shape
    assert Cin == Cin_w and KH == 3 and KW == 3
    # MaxPool2d(2, 2) floors odd sizes; the formulation below matches that naturally.
    Hp, Wp = H // 2, W // 2
    P = Hp * Wp
    Hpad, Wpad = H + 2, W + 2
    Spad = Hpad * Wpad
    L = (H - 1) * Wpad + W
    Lm = L - 1 - Wpad
    K = KH * KW * Cin

    TN = _pick_images_per_block(N)
    NB = N // TN

    # bf16 MXU operands, f32 accumulation inside the kernel.
    x_flat = x_nchw.reshape(N, Cin, H * W).astype(jnp.bfloat16)
    w_mat = jnp.transpose(conv_w, (0, 2, 3, 1)).reshape(Cout, K).astype(jnp.bfloat16)
    b_col = conv_b.reshape(Cout, 1).astype(jnp.float32)

    # Hoisted 0/1 pooling-compaction matrix: built once at trace time (numpy),
    # DMA'd once thanks to its constant index_map; one 1 per output column.
    sel_np = np.zeros((Lm, P), np.float32)
    for hh in range(Hp):
        for ww in range(Wp):
            sel_np[2 * hh * Wpad + 2 * ww, hh * Wp + ww] = 1.0
    sel = jnp.asarray(sel_np, dtype=jnp.bfloat16)

    kernel = functools.partial(_fused_conv_relu_pool_kernel,
                               H=H, W=W, Cin=Cin, Cout=Cout, KH=KH, KW=KW, TN=TN)

    cost = pl.CostEstimate(
        flops=2 * N * Cout * (K * H * W + Lm * P),   # conv + pooling-compaction matmul
        transcendentals=0,
        bytes_accessed=(2 * (x_flat.size + w_mat.size + sel.size)
                        + 4 * (b_col.size + NB * TN * Cout * P)),
    )

    out = pl.pallas_call(
        kernel,
        out_shape=jax.ShapeDtypeStruct((NB, TN * Cout, P), jnp.float32),
        grid_spec=pltpu.PrefetchScalarGridSpec(
            num_scalar_prefetch=0,
            grid=(NB,),
            in_specs=[
                pl.BlockSpec((TN, Cin, H * W), lambda b: (b, 0, 0)),
                pl.BlockSpec((Cout, K), lambda b: (0, 0)),
                pl.BlockSpec((Cout, 1), lambda b: (0, 0)),
                pl.BlockSpec((Lm, P), lambda b: (0, 0)),
            ],
            out_specs=pl.BlockSpec((1, TN * Cout, P), lambda b: (b, 0, 0)),
            scratch_shapes=[pltpu.VMEM((Cin, Spad), jnp.float32)],
        ),
        compiler_params=pltpu.CompilerParams(
            dimension_semantics=("parallel",)),
        cost_estimate=cost,
    )(x_flat, w_mat, b_col, sel)

    # Output is already (N*Cout, P) in NCHW order: final reshape is free.
    return out.reshape(N, Cout, Hp, Wp)


# ----------------------------------------------------------------------------
# Parameter init (deterministic, mirrors PyTorch shapes / init)
# ----------------------------------------------------------------------------
def init_params(key):
    kw_, kb_ = jax.random.split(key)
    fan_in = 3 * 3 * 3
    fan_out = 8 * 3 * 3
    bound_w = (6.0 / (fan_in + fan_out)) ** 0.5        # xavier_uniform_
    w = jax.random.uniform(kw_, (8, 3, 3, 3), jnp.float32, -bound_w, bound_w)
    bound_b = 1.0 / (fan_in ** 0.5)                    # PyTorch Conv2d default bias init
    b = jax.random.uniform(kb_, (8,), jnp.float32, -bound_b, bound_b)
    return w, b


# ----------------------------------------------------------------------------
# Pure-numpy reference (float64) for a correctness check
# ----------------------------------------------------------------------------
def _reference_forward(x, w, b):
    x = np.asarray(x, np.float64)
    w = np.asarray(w, np.float64)
    b = np.asarray(b, np.float64)
    N, Cin, H, W = x.shape
    Cout, _, KH, KW = w.shape
    xp = np.pad(x, ((0, 0), (0, 0), (1, 1), (1, 1)))
    y = np.zeros((N, Cout, H, W))
    for kh in range(KH):
        for kw in range(KW):
            patch = xp[:, :, kh:kh + H, kw:kw + W]
            y += np.einsum("oc,nchw->nohw", w[:, :, kh, kw], patch)
    y += b[None, :, None, None]
    y = np.maximum(y, 0.0)
    y = y.reshape(N, Cout, H // 2, 2, W // 2, 2).max(axis=(3, 5))
    return y


if __name__ == "__main__":
    key = jax.random.PRNGKey(0)
    k_params, k_x = jax.random.split(key)

    conv_w, conv_b = init_params(k_params)
    x = jax.random.normal(k_x, (2, 3, 16, 16), jnp.float32)     # NCHW, Conv2d(3->8)

    out = net_forward(x, conv_w, conv_b)
    jax.block_until_ready(out)

    assert out.shape == (2, 8, 8, 8), out.shape
    ref = _reference_forward(np.asarray(x), np.asarray(conv_w), np.asarray(conv_b))
    # Tolerance reflects bf16 conv operands (accumulation stays f32).
    err = float(np.max(np.abs(np.asarray(out, np.float64) - ref)))
    assert np.allclose(np.asarray(out), ref, rtol=2e-2, atol=2e-2), (
        "max abs err = %g" % err)
    print("KERNEL_OK")
</pallas_src>

<mosaic_0001>
module attributes {stable_mosaic.version = 11 : i64} {
  func.func @_fused_conv_relu_pool_kernel(%arg0: i32, %arg1: memref<1x3x256xbf16, #tpu.memory_space<vmem>>, %arg2: memref<8x27xbf16, #tpu.memory_space<vmem>>, %arg3: memref<8x1xf32, #tpu.memory_space<vmem>>, %arg4: memref<267x64xbf16, #tpu.memory_space<vmem>>, %arg5: memref<1x8x64xf32, #tpu.memory_space<vmem>>, %arg6: memref<3x324xf32, #tpu.memory_space<vmem>>) attributes {dimension_semantics = [#tpu.dimension_semantics<parallel>], iteration_bounds = array<i64: 2>, scalar_prefetch = 0 : i64, scratch_operands = 1 : i64, tpu.core_type = #tpu.core_type<tc>, window_params = [{transform_indices = @transform_0, window_bounds = array<i64: 1, 3, 256>}, {pipeline_mode = #tpu.pipeline_mode<synchronous>, transform_indices = @transform_1, window_bounds = array<i64: 8, 27>}, {pipeline_mode = #tpu.pipeline_mode<synchronous>, transform_indices = @transform_2, window_bounds = array<i64: 8, 1>}, {pipeline_mode = #tpu.pipeline_mode<synchronous>, transform_indices = @transform_3, window_bounds = array<i64: 267, 64>}, {transform_indices = @transform_4, window_bounds = array<i64: 1, 8, 64>}]} {
    %c0 = arith.constant 0 : index
    %c0_0 = arith.constant 0 : index
    %0 = vector.load %arg2[%c0, %c0_0] : memref<8x27xbf16, #tpu.memory_space<vmem>>, vector<8x27xbf16>
    %c0_1 = arith.constant 0 : index
    %c0_2 = arith.constant 0 : index
    %1 = vector.load %arg3[%c0_1, %c0_2] : memref<8x1xf32, #tpu.memory_space<vmem>>, vector<8x1xf32>
    %c0_3 = arith.constant 0 : index
    %c0_4 = arith.constant 0 : index
    %2 = vector.load %arg4[%c0_3, %c0_4] : memref<267x64xbf16, #tpu.memory_space<vmem>>, vector<267x64xbf16>
    %cst = arith.constant 0.000000e+00 : f32
    %3 = vector.broadcast %cst : f32 to vector<3x324xf32>
    %c0_5 = arith.constant 0 : index
    %c0_6 = arith.constant 0 : index
    %4 = vector.load %arg6[%c0_5, %c0_6] : memref<3x324xf32, #tpu.memory_space<vmem>>, vector<3x324xf32>
    tpu.vector_store %arg6[%c0_5, %c0_6], %3 {strides = array<i32>} : memref<3x324xf32, #tpu.memory_space<vmem>>, vector<3x324xf32>,
    %c0_7 = arith.constant 0 : index
    %c0_8 = arith.constant 0 : index
    %c0_9 = arith.constant 0 : index
    %5 = vector.load %arg1[%c0_7, %c0_8, %c0_9] : memref<1x3x256xbf16, #tpu.memory_space<vmem>>, vector<1x3x16xbf16>
    %6 = vector.shape_cast %5 : vector<1x3x16xbf16> to vector<3x16xbf16>
    %7 = arith.extf %6 : vector<3x16xbf16> to vector<3x16xf32>
    %c0_10 = arith.constant 0 : index
    %c19 = arith.constant 19 : index
    %8 = vector.load %arg6[%c0_10, %c19] : memref<3x324xf32, #tpu.memory_space<vmem>>, vector<3x16xf32>
    tpu.vector_store %arg6[%c0_10, %c19], %7 {strides = array<i32>} : memref<3x324xf32, #tpu.memory_space<vmem>>, vector<3x16xf32>,
    %c0_11 = arith.constant 0 : index
    %c0_12 = arith.constant 0 : index
    %c16 = arith.constant 16 : index
    %9 = vector.load %arg1[%c0_11, %c0_12, %c16] : memref<1x3x256xbf16, #tpu.memory_space<vmem>>, vector<1x3x16xbf16>
    %10 = vector.shape_cast %9 : vector<1x3x16xbf16> to vector<3x16xbf16>
    %11 = arith.extf %10 : vector<3x16xbf16> to vector<3x16xf32>
    %c0_13 = arith.constant 0 : index
    %c37 = arith.constant 37 : index
    %12 = vector.load %arg6[%c0_13, %c37] : memref<3x324xf32, #tpu.memory_space<vmem>>, vector<3x16xf32>
    tpu.vector_store %arg6[%c0_13, %c37], %11 {strides = array<i32>} : memref<3x324xf32, #tpu.memory_space<vmem>>, vector<3x16xf32>,
    %c0_14 = arith.constant 0 : index
    %c0_15 = arith.constant 0 : index
    %c32 = arith.constant 32 : index
    %13 = vector.load %arg1[%c0_14, %c0_15, %c32] : memref<1x3x256xbf16, #tpu.memory_space<vmem>>, vector<1x3x16xbf16>
    %14 = vector.shape_cast %13 : vector<1x3x16xbf16> to vector<3x16xbf16>
    %15 = arith.extf %14 : vector<3x16xbf16> to vector<3x16xf32>
    %c0_16 = arith.constant 0 : index
    %c55 = arith.constant 55 : index
    %16 = vector.load %arg6[%c0_16, %c55] : memref<3x324xf32, #tpu.memory_space<vmem>>, vector<3x16xf32>
    tpu.vector_store %arg6[%c0_16, %c55], %15 {strides = array<i32>} : memref<3x324xf32, #tpu.memory_space<vmem>>, vector<3x16xf32>,
    %c0_17 = arith.constant 0 : index
    %c0_18 = arith.constant 0 : index
    %c48 = arith.constant 48 : index
    %17 = vector.load %arg1[%c0_17, %c0_18, %c48] : memref<1x3x256xbf16, #tpu.memory_space<vmem>>, vector<1x3x16xbf16>
    %18 = vector.shape_cast %17 : vector<1x3x16xbf16> to vector<3x16xbf16>
    %19 = arith.extf %18 : vector<3x16xbf16> to vector<3x16xf32>
    %c0_19 = arith.constant 0 : index
    %c73 = arith.constant 73 : index
    %20 = vector.load %arg6[%c0_19, %c73] : memref<3x324xf32, #tpu.memory_space<vmem>>, vector<3x16xf32>
    tpu.vector_store %arg6[%c0_19, %c73], %19 {strides = array<i32>} : memref<3x324xf32, #tpu.memory_space<vmem>>, vector<3x16xf32>,
    %c0_20 = arith.constant 0 : index
    %c0_21 = arith.constant 0 : index
    %c64 = arith.constant 64 : index
    %21 = vector.load %arg1[%c0_20, %c0_21, %c64] : memref<1x3x256xbf16, #tpu.memory_space<vmem>>, vector<1x3x16xbf16>
    %22 = vector.shape_cast %21 : vector<1x3x16xbf16> to vector<3x16xbf16>
    %23 = arith.extf %22 : vector<3x16xbf16> to vector<3x16xf32>
    %c0_22 = arith.constant 0 : index
    %c91 = arith.constant 91 : index
    %24 = vector.load %arg6[%c0_22, %c91] : memref<3x324xf32, #tpu.memory_space<vmem>>, vector<3x16xf32>
    tpu.vector_store %arg6[%c0_22, %c91], %23 {strides = array<i32>} : memref<3x324xf32, #tpu.memory_space<vmem>>, vector<3x16xf32>,
    %c0_23 = arith.constant 0 : index
    %c0_24 = arith.constant 0 : index
    %c80 = arith.constant 80 : index
    %25 = vector.load %arg1[%c0_23, %c0_24, %c80] : memref<1x3x256xbf16, #tpu.memory_space<vmem>>, vector<1x3x16xbf16>
    %26 = vector.shape_cast %25 : vector<1x3x16xbf16> to vector<3x16xbf16>
    %27 = arith.extf %26 : vector<3x16xbf16> to vector<3x16xf32>
    %c0_25 = arith.constant 0 : index
    %c109 = arith.constant 109 : index
    %28 = vector.load %arg6[%c0_25, %c109] : memref<3x324xf32, #tpu.memory_space<vmem>>, vector<3x16xf32>
    tpu.vector_store %arg6[%c0_25, %c109], %27 {strides = array<i32>} : memref<3x324xf32, #tpu.memory_space<vmem>>, vector<3x16xf32>,
    %c0_26 = arith.constant 0 : index
    %c0_27 = arith.constant 0 : index
    %c96 = arith.constant 96 : index
    %29 = vector.load %arg1[%c0_26, %c0_27, %c96] : memref<1x3x256xbf16, #tpu.memory_space<vmem>>, vector<1x3x16xbf16>
    %30 = vector.shape_cast %29 : vector<1x3x16xbf16> to vector<3x16xbf16>
    %31 = arith.extf %30 : vector<3x16xbf16> to vector<3x16xf32>
    %c0_28 = arith.constant 0 : index
    %c127 = arith.constant 127 : index
    %32 = vector.load %arg6[%c0_28, %c127] : memref<3x324xf32, #tpu.memory_space<vmem>>, vector<3x16xf32>
    tpu.vector_store %arg6[%c0_28, %c127], %31 {strides = array<i32>} : memref<3x324xf32, #tpu.memory_space<vmem>>, vector<3x16xf32>,
    %c0_29 = arith.constant 0 : index
    %c0_30 = arith.constant 0 : index
    %c112 = arith.constant 112 : index
    %33 = vector.load %arg1[%c0_29, %c0_30, %c112] : memref<1x3x256xbf16, #tpu.memory_space<vmem>>, vector<1x3x16xbf16>
    %34 = vector.shape_cast %33 : vector<1x3x16xbf16> to vector<3x16xbf16>
    %35 = arith.extf %34 : vector<3x16xbf16> to vector<3x16xf32>
    %c0_31 = arith.constant 0 : index
    %c145 = arith.constant 145 : index
    %36 = vector.load %arg6[%c0_31, %c145] : memref<3x324xf32, #tpu.memory_space<vmem>>, vector<3x16xf32>
    tpu.vector_store %arg6[%c0_31, %c145], %35 {strides = array<i32>} : memref<3x324xf32, #tpu.memory_space<vmem>>, vector<3x16xf32>,
    %c0_32 = arith.constant 0 : index
    %c0_33 = arith.constant 0 : index
    %c128 = arith.constant 128 : index
    %37 = vector.load %arg1[%c0_32, %c0_33, %c128] : memref<1x3x256xbf16, #tpu.memory_space<vmem>>, vector<1x3x16xbf16>
    %38 = vector.shape_cast %37 : vector<1x3x16xbf16> to vector<3x16xbf16>
    %39 = arith.extf %38 : vector<3x16xbf16> to vector<3x16xf32>
    %c0_34 = arith.constant 0 : index
    %c163 = arith.constant 163 : index
    %40 = vector.load %arg6[%c0_34, %c163] : memref<3x324xf32, #tpu.memory_space<vmem>>, vector<3x16xf32>
    tpu.vector_store %arg6[%c0_34, %c163], %39 {strides = array<i32>} : memref<3x324xf32, #tpu.memory_space<vmem>>, vector<3x16xf32>,
    %c0_35 = arith.constant 0 : index
    %c0_36 = arith.constant 0 : index
    %c144 = arith.constant 144 : index
    %41 = vector.load %arg1[%c0_35, %c0_36, %c144] : memref<1x3x256xbf16, #tpu.memory_space<vmem>>, vector<1x3x16xbf16>
    %42 = vector.shape_cast %41 : vector<1x3x16xbf16> to vector<3x16xbf16>
    %43 = arith.extf %42 : vector<3x16xbf16> to vector<3x16xf32>
    %c0_37 = arith.constant 0 : index
    %c181 = arith.constant 181 : index
    %44 = vector.load %arg6[%c0_37, %c181] : memref<3x324xf32, #tpu.memory_space<vmem>>, vector<3x16xf32>
    tpu.vector_store %arg6[%c0_37, %c181], %43 {strides = array<i32>} : memref<3x324xf32, #tpu.memory_space<vmem>>, vector<3x16xf32>,
    %c0_38 = arith.constant 0 : index
    %c0_39 = arith.constant 0 : index
    %c160 = arith.constant 160 : index
    %45 = vector.load %arg1[%c0_38, %c0_39, %c160] : memref<1x3x256xbf16, #tpu.memory_space<vmem>>, vector<1x3x16xbf16>
    %46 = vector.shape_cast %45 : vector<1x3x16xbf16> to vector<3x16xbf16>
    %47 = arith.extf %46 : vector<3x16xbf16> to vector<3x16xf32>
    %c0_40 = arith.constant 0 : index
    %c199 = arith.constant 199 : index
    %48 = vector.load %arg6[%c0_40, %c199] : memref<3x324xf32, #tpu.memory_space<vmem>>, vector<3x16xf32>
    tpu.vector_store %arg6[%c0_40, %c199], %47 {strides = array<i32>} : memref<3x324xf32, #tpu.memory_space<vmem>>, vector<3x16xf32>,
    %c0_41 = arith.constant 0 : index
    %c0_42 = arith.constant 0 : index
    %c176 = arith.constant 176 : index
    %49 = vector.load %arg1[%c0_41, %c0_42, %c176] : memref<1x3x256xbf16, #tpu.memory_space<vmem>>, vector<1x3x16xbf16>
    %50 = vector.shape_cast %49 : vector<1x3x16xbf16> to vector<3x16xbf16>
    %51 = arith.extf %50 : vector<3x16xbf16> to vector<3x16xf32>
    %c0_43 = arith.constant 0 : index
    %c217 = arith.constant 217 : index
    %52 = vector.load %arg6[%c0_43, %c217] : memref<3x324xf32, #tpu.memory_space<vmem>>, vector<3x16xf32>
    tpu.vector_store %arg6[%c0_43, %c217], %51 {strides = array<i32>} : memref<3x324xf32, #tpu.memory_space<vmem>>, vector<3x16xf32>,
    %c0_44 = arith.constant 0 : index
    %c0_45 = arith.constant 0 : index
    %c192 = arith.constant 192 : index
    %53 = vector.load %arg1[%c0_44, %c0_45, %c192] : memref<1x3x256xbf16, #tpu.memory_space<vmem>>, vector<1x3x16xbf16>
    %54 = vector.shape_cast %53 : vector<1x3x16xbf16> to vector<3x16xbf16>
    %55 = arith.extf %54 : vector<3x16xbf16> to vector<3x16xf32>
    %c0_46 = arith.constant 0 : index
    %c235 = arith.constant 235 : index
    %56 = vector.load %arg6[%c0_46, %c235] : memref<3x324xf32, #tpu.memory_space<vmem>>, vector<3x16xf32>
    tpu.vector_store %arg6[%c0_46, %c235], %55 {strides = array<i32>} : memref<3x324xf32, #tpu.memory_space<vmem>>, vector<3x16xf32>,
    %c0_47 = arith.constant 0 : index
    %c0_48 = arith.constant 0 : index
    %c208 = arith.constant 208 : index
    %57 = vector.load %arg1[%c0_47, %c0_48, %c208] : memref<1x3x256xbf16, #tpu.memory_space<vmem>>, vector<1x3x16xbf16>
    %58 = vector.shape_cast %57 : vector<1x3x16xbf16> to vector<3x16xbf16>
    %59 = arith.extf %58 : vector<3x16xbf16> to vector<3x16xf32>
    %c0_49 = arith.constant 0 : index
    %c253 = arith.constant 253 : index
    %60 = vector.load %arg6[%c0_49, %c253] : memref<3x324xf32, #tpu.memory_space<vmem>>, vector<3x16xf32>
    tpu.vector_store %arg6[%c0_49, %c253], %59 {strides = array<i32>} : memref<3x324xf32, #tpu.memory_space<vmem>>, vector<3x16xf32>,
    %c0_50 = arith.constant 0 : index
    %c0_51 = arith.constant 0 : index
    %c224 = arith.constant 224 : index
    %61 = vector.load %arg1[%c0_50, %c0_51, %c224] : memref<1x3x256xbf16, #tpu.memory_space<vmem>>, vector<1x3x16xbf16>
    %62 = vector.shape_cast %61 : vector<1x3x16xbf16> to vector<3x16xbf16>
    %63 = arith.extf %62 : vector<3x16xbf16> to vector<3x16xf32>
    %c0_52 = arith.constant 0 : index
    %c271 = arith.constant 271 : index
    %64 = vector.load %arg6[%c0_52, %c271] : memref<3x324xf32, #tpu.memory_space<vmem>>, vector<3x16xf32>
    tpu.vector_store %arg6[%c0_52, %c271], %63 {strides = array<i32>} : memref<3x324xf32, #tpu.memory_space<vmem>>, vector<3x16xf32>,
    %c0_53 = arith.constant 0 : index
    %c0_54 = arith.constant 0 : index
    %c240 = arith.constant 240 : index
    %65 = vector.load %arg1[%c0_53, %c0_54, %c240] : memref<1x3x256xbf16, #tpu.memory_space<vmem>>, vector<1x3x16xbf16>
    %66 = vector.shape_cast %65 : vector<1x3x16xbf16> to vector<3x16xbf16>
    %67 = arith.extf %66 : vector<3x16xbf16> to vector<3x16xf32>
    %c0_55 = arith.constant 0 : index
    %c289 = arith.constant 289 : index
    %68 = vector.load %arg6[%c0_55, %c289] : memref<3x324xf32, #tpu.memory_space<vmem>>, vector<3x16xf32>
    tpu.vector_store %arg6[%c0_55, %c289], %67 {strides = array<i32>} : memref<3x324xf32, #tpu.memory_space<vmem>>, vector<3x16xf32>,
    %c0_56 = arith.constant 0 : index
    %c0_57 = arith.constant 0 : index
    %69 = vector.load %arg6[%c0_56, %c0_57] : memref<3x324xf32, #tpu.memory_space<vmem>>, vector<3x324xf32>
    %70 = arith.truncf %69 : vector<3x324xf32> to vector<3x324xbf16>
    %cst_58 = arith.constant 0.000000e+00 : f32
    %71 = vector.broadcast %cst_58 : f32 to vector<8x286xf32>
    %72 = vector.extract_strided_slice %70 {offsets = [0, 0], sizes = [3, 286], strides = [1, 1]} : vector<3x324xbf16> to vector<3x286xbf16>
    %73 = vector.extract_strided_slice %0 {offsets = [0, 0], sizes = [8, 3], strides = [1, 1]} : vector<8x27xbf16> to vector<8x3xbf16>
    %cst_59 = arith.constant dense<0.000000e+00> : vector<8x286xf32>
    %74 = tpu.matmul %73, %72, %cst_59 {dimension_numbers = #tpu.dot_dimension_numbers<[1], [0], [0], [1], [0, 0, 1, 1], [], []>} : vector<8x3xbf16>, vector<3x286xbf16>, vector<8x286xf32> -> vector<8x286xf32>
    %75 = arith.addf %71, %74 : vector<8x286xf32>
    %76 = vector.extract_strided_slice %70 {offsets = [0, 1], sizes = [3, 286], strides = [1, 1]} : vector<3x324xbf16> to vector<3x286xbf16>
    %77 = vector.extract_strided_slice %0 {offsets = [0, 3], sizes = [8, 3], strides = [1, 1]} : vector<8x27xbf16> to vector<8x3xbf16>
    %cst_60 = arith.constant dense<0.000000e+00> : vector<8x286xf32>
    %78 = tpu.matmul %77, %76, %cst_60 {dimension_numbers = #tpu.dot_dimension_numbers<[1], [0], [0], [1], [0, 0, 1, 1], [], []>} : vector<8x3xbf16>, vector<3x286xbf16>, vector<8x286xf32> -> vector<8x286xf32>
    %79 = arith.addf %75, %78 : vector<8x286xf32>
    %80 = vector.extract_strided_slice %70 {offsets = [0, 2], sizes = [3, 286], strides = [1, 1]} : vector<3x324xbf16> to vector<3x286xbf16>
    %81 = vector.extract_strided_slice %0 {offsets = [0, 6], sizes = [8, 3], strides = [1, 1]} : vector<8x27xbf16> to vector<8x3xbf16>
    %cst_61 = arith.constant dense<0.000000e+00> : vector<8x286xf32>
    %82 = tpu.matmul %81, %80, %cst_61 {dimension_numbers = #tpu.dot_dimension_numbers<[1], [0], [0], [1], [0, 0, 1, 1], [], []>} : vector<8x3xbf16>, vector<3x286xbf16>, vector<8x286xf32> -> vector<8x286xf32>
    %83 = arith.addf %79, %82 : vector<8x286xf32>
    %84 = vector.extract_strided_slice %70 {offsets = [0, 18], sizes = [3, 286], strides = [1, 1]} : vector<3x324xbf16> to vector<3x286xbf16>
    %85 = vector.extract_strided_slice %0 {offsets = [0, 9], sizes = [8, 3], strides = [1, 1]} : vector<8x27xbf16> to vector<8x3xbf16>
    %cst_62 = arith.constant dense<0.000000e+00> : vector<8x286xf32>
    %86 = tpu.matmul %85, %84, %cst_62 {dimension_numbers = #tpu.dot_dimension_numbers<[1], [0], [0], [1], [0, 0, 1, 1], [], []>} : vector<8x3xbf16>, vector<3x286xbf16>, vector<8x286xf32> -> vector<8x286xf32>
    %87 = arith.addf %83, %86 : vector<8x286xf32>
    %88 = vector.extract_strided_slice %70 {offsets = [0, 19], sizes = [3, 286], strides = [1, 1]} : vector<3x324xbf16> to vector<3x286xbf16>
    %89 = vector.extract_strided_slice %0 {offsets = [0, 12], sizes = [8, 3], strides = [1, 1]} : vector<8x27xbf16> to vector<8x3xbf16>
    %cst_63 = arith.constant dense<0.000000e+00> : vector<8x286xf32>
    %90 = tpu.matmul %89, %88, %cst_63 {dimension_numbers = #tpu.dot_dimension_numbers<[1], [0], [0], [1], [0, 0, 1, 1], [], []>} : vector<8x3xbf16>, vector<3x286xbf16>, vector<8x286xf32> -> vector<8x286xf32>
    %91 = arith.addf %87, %90 : vector<8x286xf32>
    %92 = vector.extract_strided_slice %70 {offsets = [0, 20], sizes = [3, 286], strides = [1, 1]} : vector<3x324xbf16> to vector<3x286xbf16>
    %93 = vector.extract_strided_slice %0 {offsets = [0, 15], sizes = [8, 3], strides = [1, 1]} : vector<8x27xbf16> to vector<8x3xbf16>
    %cst_64 = arith.constant dense<0.000000e+00> : vector<8x286xf32>
    %94 = tpu.matmul %93, %92, %cst_64 {dimension_numbers = #tpu.dot_dimension_numbers<[1], [0], [0], [1], [0, 0, 1, 1], [], []>} : vector<8x3xbf16>, vector<3x286xbf16>, vector<8x286xf32> -> vector<8x286xf32>
    %95 = arith.addf %91, %94 : vector<8x286xf32>
    %96 = vector.extract_strided_slice %70 {offsets = [0, 36], sizes = [3, 286], strides = [1, 1]} : vector<3x324xbf16> to vector<3x286xbf16>
    %97 = vector.extract_strided_slice %0 {offsets = [0, 18], sizes = [8, 3], strides = [1, 1]} : vector<8x27xbf16> to vector<8x3xbf16>
    %cst_65 = arith.constant dense<0.000000e+00> : vector<8x286xf32>
    %98 = tpu.matmul %97, %96, %cst_65 {dimension_numbers = #tpu.dot_dimension_numbers<[1], [0], [0], [1], [0, 0, 1, 1], [], []>} : vector<8x3xbf16>, vector<3x286xbf16>, vector<8x286xf32> -> vector<8x286xf32>
    %99 = arith.addf %95, %98 : vector<8x286xf32>
    %100 = vector.extract_strided_slice %70 {offsets = [0, 37], sizes = [3, 286], strides = [1, 1]} : vector<3x324xbf16> to vector<3x286xbf16>
    %101 = vector.extract_strided_slice %0 {offsets = [0, 21], sizes = [8, 3], strides = [1, 1]} : vector<8x27xbf16> to vector<8x3xbf16>
    %cst_66 = arith.constant dense<0.000000e+00> : vector<8x286xf32>
    %102 = tpu.matmul %101, %100, %cst_66 {dimension_numbers = #tpu.dot_dimension_numbers<[1], [0], [0], [1], [0, 0, 1, 1], [], []>} : vector<8x3xbf16>, vector<3x286xbf16>, vector<8x286xf32> -> vector<8x286xf32>
    %103 = arith.addf %99, %102 : vector<8x286xf32>
    %104 = vector.extract_strided_slice %70 {offsets = [0, 38], sizes = [3, 286], strides = [1, 1]} : vector<3x324xbf16> to vector<3x286xbf16>
    %105 = vector.extract_strided_slice %0 {offsets = [0, 24], sizes = [8, 3], strides = [1, 1]} : vector<8x27xbf16> to vector<8x3xbf16>
    %cst_67 = arith.constant dense<0.000000e+00> : vector<8x286xf32>
    %106 = tpu.matmul %105, %104, %cst_67 {dimension_numbers = #tpu.dot_dimension_numbers<[1], [0], [0], [1], [0, 0, 1, 1], [], []>} : vector<8x3xbf16>, vector<3x286xbf16>, vector<8x286xf32> -> vector<8x286xf32>
    %107 = arith.addf %103, %106 : vector<8x286xf32>
    %108 = vector.broadcast %1 : vector<8x1xf32> to vector<8x286xf32>
    %109 = arith.addf %107, %108 : vector<8x286xf32>
    %cst_68 = arith.constant 0.000000e+00 : f32
    %110 = vector.broadcast %cst_68 : f32 to vector<8x286xf32>
    %111 = arith.maximumf %109, %110 : vector<8x286xf32>
    %112 = vector.extract_strided_slice %111 {offsets = [0, 0], sizes = [8, 285], strides = [1, 1]} : vector<8x286xf32> to vector<8x285xf32>
    %113 = vector.extract_strided_slice %111 {offsets = [0, 1], sizes = [8, 285], strides = [1, 1]} : vector<8x286xf32> to vector<8x285xf32>
    %114 = arith.maximumf %112, %113 : vector<8x285xf32>
    %115 = vector.extract_strided_slice %114 {offsets = [0, 0], sizes = [8, 267], strides = [1, 1]} : vector<8x285xf32> to vector<8x267xf32>
    %116 = vector.extract_strided_slice %114 {offsets = [0, 18], sizes = [8, 267], strides = [1, 1]} : vector<8x285xf32> to vector<8x267xf32>
    %117 = arith.maximumf %115, %116 : vector<8x267xf32>
    %118 = arith.truncf %117 : vector<8x267xf32> to vector<8x267xbf16>
    %cst_69 = arith.constant dense<0.000000e+00> : vector<8x64xf32>
    %119 = tpu.matmul %118, %2, %cst_69 {dimension_numbers = #tpu.dot_dimension_numbers<[1], [0], [0], [1], [0, 0, 1, 1], [], []>} : vector<8x267xbf16>, vector<267x64xbf16>, vector<8x64xf32> -> vector<8x64xf32>
    %c0_70 = arith.constant 0 : index
    %c0_71 = arith.constant 0 : index
    %c0_72 = arith.constant 0 : index
    %120 = vector.load %arg5[%c0_70, %c0_71, %c0_72] : memref<1x8x64xf32, #tpu.memory_space<vmem>>, vector<1x8x64xf32>
    %121 = vector.shape_cast %120 : vector<1x8x64xf32> to vector<8x64xf32>
    %122 = vector.shape_cast %119 : vector<8x64xf32> to vector<1x8x64xf32>
    tpu.vector_store %arg5[%c0_70, %c0_71, %c0_72], %122 {strides = array<i32>} : memref<1x8x64xf32, #tpu.memory_space<vmem>>, vector<1x8x64xf32>,
    return
  }
  func.func @transform_0(%arg0: i32) -> (i32, i32, i32) {
    %c0_i32 = arith.constant 0 : i32
    %c0_i32_0 = arith.constant 0 : i32
    %c0_i32_1 = arith.constant 0 : i32
    return %arg0, %c0_i32, %c0_i32_0 : i32, i32, i32
  }
  func.func @transform_1(%arg0: i32) -> (i32, i32) {
    %c0_i32 = arith.constant 0 : i32
    %c0_i32_0 = arith.constant 0 : i32
    %c0_i32_1 = arith.constant 0 : i32
    return %c0_i32, %c0_i32_0 : i32, i32
  }
  func.func @transform_2(%arg0: i32) -> (i32, i32) {
    %c0_i32 = arith.constant 0 : i32
    %c0_i32_0 = arith.constant 0 : i32
    %c0_i32_1 = arith.constant 0 : i32
    return %c0_i32, %c0_i32_0 : i32, i32
  }
  func.func @transform_3(%arg0: i32) -> (i32, i32) {
    %c0_i32 = arith.constant 0 : i32
    %c0_i32_0 = arith.constant 0 : i32
    %c0_i32_1 = arith.constant 0 : i32
    return %c0_i32, %c0_i32_0 : i32, i32
  }
  func.func @transform_4(%arg0: i32) -> (i32, i32, i32) {
    %c0_i32 = arith.constant 0 : i32
    %c0_i32_0 = arith.constant 0 : i32
    %c0_i32_1 = arith.constant 0 : i32
    return %arg0, %c0_i32, %c0_i32_0 : i32, i32, i32
  }
}

</mosaic_0001>

<llo_original>
// kernel: net_forward.1
$region0: #{net_forward.1}
  #allocation0 [shape = 'u32[]', space=smem, size = 0x4, offset = 0x4, fixed_abs, tag = 'smem constant byte address 0x4 - core index']
  #allocation1 [shape = 'u32[72,128]{1,0:T(1,128)}', space=vmem, size = 0x9000, scoped, tag = 'internal scratch']
  #allocation2 [shape = 'f32[3,324]{1,0:T(4,128)}', space=vmem, size = 0x1800, scoped, tag = 'scratch operand']
  %s0 = inlined_call_operand.vmem [shape: bf16[2,3,256], index: 0, kind: input, shape index: {}]
  %s1 = inlined_call_operand.vmem [shape: bf16[8,27], index: 1, kind: input, shape index: {}]
  %s2 = inlined_call_operand.vmem [shape: f32[8,1], index: 2, kind: input, shape index: {}]
  %s3 = inlined_call_operand.vmem [shape: bf16[267,64], index: 3, kind: input, shape index: {}]
  %s4 = inlined_call_operand.vmem [shape: f32[2,8,64], index: 4, kind: output, shape index: {}]
  %s5 = sld [smem:[#allocation0]]
  $region49: #{net_forward.1} parent=0
    _
  %s7 = ssub.s32 1, %s5
  %s8 = scalar_select 0, %s7, %s5
  loop: start=0, step=1, limit=4
  $region2: #{net_forward.1} parent=0 // loop_pre_header
    _
  $region3: #{net_forward.1} parent=0 // loop_header
    %s10 = sphi 0, %s14
    %p11 = scmp.ge.s32.totalorder %s10, 4
    %s20 = sphi 0, %s22
    %s23 = sphi 0, %s20
    %s24 = sphi 0, %s23
    %s40 = sphi 0, %s24
    %s44 = sphi 0, %s44
    %s46 = sphi 0, %s44
    %s47 = sphi 0, %s46
    %s61 = sphi 0, %s47
    %s65 = sphi 0, %s65
    %s67 = sphi 0, %s65
    %s68 = sphi 0, %s67
    %s82 = sphi 0, %s68
    %s86 = sphi 0, %s86
    %s88 = sphi 0, %s86
    %s89 = sphi 0, %s88
    %s103 = sphi 0, %s89
    %s109 = sphi 0, %s111
    %s112 = sphi 0, %s109
    %s113 = sphi 0, %s112
    %s129 = sphi 0, %s113
  $region4: #{net_forward.1} parent=0 // loop_header_branch
    %13 = sbr.rel (%p11) target = $region8
  $region5: #{net_forward.1} parent=0 // loop_body
    %s15 = ssub.s32 %s10, 1
    %s16 = ssub.s32 %s10, 2
    %s17 = sadd.s32 %s10, 1
    %s18 = ssub.s32 %s10, %s17
    %p19 = scmp.eq.s32.totalorder %s18, 0
    %s21 = sadd.s32 %s20, 1
    %s22 = scalar_select %p19, %s20, %s21
    %p25 = pneg %p19
    %p26 = scmp.eq.s32.totalorder %s10, 1
    %p27 = por %p25, %p26
    %p28 = scmp.ne.s32.totalorder %s20, %s23
    %p29 = scmp.eq.s32.totalorder %s10, 0
    %p30 = por %p28, %p29
    %p31 = scmp.ne.s32.totalorder %s20, %s23
    %p32 = scmp.eq.s32.totalorder %s15, 1
    %p33 = por %p31, %p32
    %p34 = scmp.ne.s32.totalorder %s23, %s24
    %p35 = scmp.eq.s32.totalorder %s15, 0
    %p36 = por %p34, %p35
    %p37 = scmp.ne.s32.totalorder %s23, %s24
    %p38 = scmp.eq.s32.totalorder %s16, 1
    %p39 = por %p37, %p38
    %p41 = scmp.ne.s32.totalorder %s24, %s40
    %p42 = scmp.eq.s32.totalorder %s16, 0
    %p43 = por %p41, %p42
    %s45 = sadd.s32 %s44, 1
    %p48 = scmp.eq.s32.totalorder %s10, 1
    %p49 = scmp.ne.s32.totalorder %s44, %s46
    %p50 = scmp.eq.s32.totalorder %s10, 0
    %p51 = por %p49, %p50
    %p52 = scmp.ne.s32.totalorder %s44, %s46
    %p53 = scmp.eq.s32.totalorder %s15, 1
    %p54 = por %p52, %p53
    %p55 = scmp.ne.s32.totalorder %s46, %s47
    %p56 = scmp.eq.s32.totalorder %s15, 0
    %p57 = por %p55, %p56
    %p58 = scmp.ne.s32.totalorder %s46, %s47
    %p59 = scmp.eq.s32.totalorder %s16, 1
    %p60 = por %p58, %p59
    %p62 = scmp.ne.s32.totalorder %s47, %s61
    %p63 = scmp.eq.s32.totalorder %s16, 0
    %p64 = por %p62, %p63
    %s66 = sadd.s32 %s65, 1
    %p69 = scmp.eq.s32.totalorder %s10, 1
    %p70 = scmp.ne.s32.totalorder %s65, %s67
    %p71 = scmp.eq.s32.totalorder %s10, 0
    %p72 = por %p70, %p71
    %p73 = scmp.ne.s32.totalorder %s65, %s67
    %p74 = scmp.eq.s32.totalorder %s15, 1
    %p75 = por %p73, %p74
    %p76 = scmp.ne.s32.totalorder %s67, %s68
    %p77 = scmp.eq.s32.totalorder %s15, 0
    %p78 = por %p76, %p77
    %p79 = scmp.ne.s32.totalorder %s67, %s68
    %p80 = scmp.eq.s32.totalorder %s16, 1
    %p81 = por %p79, %p80
    %p83 = scmp.ne.s32.totalorder %s68, %s82
    %p84 = scmp.eq.s32.totalorder %s16, 0
    %p85 = por %p83, %p84
    %s87 = sadd.s32 %s86, 1
    %p90 = scmp.eq.s32.totalorder %s10, 1
    %p91 = scmp.ne.s32.totalorder %s86, %s88
    %p92 = scmp.eq.s32.totalorder %s10, 0
    %p93 = por %p91, %p92
    %p94 = scmp.ne.s32.totalorder %s86, %s88
    %p95 = scmp.eq.s32.totalorder %s15, 1
    %p96 = por %p94, %p95
    %p97 = scmp.ne.s32.totalorder %s88, %s89
    %p98 = scmp.eq.s32.totalorder %s15, 0
    %p99 = por %p97, %p98
    %p100 = scmp.ne.s32.totalorder %s88, %s89
    %p101 = scmp.eq.s32.totalorder %s16, 1
    %p102 = por %p100, %p101
    %p104 = scmp.ne.s32.totalorder %s89, %s103
    %p105 = scmp.eq.s32.totalorder %s16, 0
    %p106 = por %p104, %p105
    %s107 = ssub.s32 %s10, %s17
    %p108 = scmp.eq.s32.totalorder %s107, 0
    %s110 = sadd.s32 %s109, 1
    %s111 = scalar_select %p108, %s109, %s110
    %p114 = pneg %p108
    %p115 = scmp.eq.s32.totalorder %s10, 1
    %p116 = por %p114, %p115
    %p117 = scmp.ne.s32.totalorder %s109, %s112
    %p118 = scmp.eq.s32.totalorder %s10, 0
    %p119 = por %p117, %p118
    %p120 = scmp.ne.s32.totalorder %s109, %s112
    %p121 = scmp.eq.s32.totalorder %s15, 1
    %p122 = por %p120, %p121
    %p123 = scmp.ne.s32.totalorder %s112, %s113
    %p124 = scmp.eq.s32.totalorder %s15, 0
    %p125 = por %p123, %p124
    %p126 = scmp.ne.s32.totalorder %s112, %s113
    %p127 = scmp.eq.s32.totalorder %s16, 1
    %p128 = por %p126, %p127
    %p130 = scmp.ne.s32.totalorder %s113, %s129
    %p131 = scmp.eq.s32.totalorder %s16, 0
    %p132 = por %p130, %p131
    %p133 = scmp.le.s32.totalorder 1, %s10
    %p134 = scmp.lt.s32.totalorder %s10, 3
    %p135 = pnand %p133, %p134
    %p136 = pneg %p135
    // Predicated region
    $region9: #{net_forward.1} parent=5 // pred_check
      _
    $region10: #{net_forward.1} parent=5 // pred_check_branch
      %138 = sbr.rel (%p135) target = $region12
    $region11: #{net_forward.1} parent=5 // pred_region
      %s139 = ssub.s32 %s10, 1
      // Predicated region
      $region13: #{net_forward.1} parent=11 // pred_check
        %p140 = pneg %p57
      $region14: #{net_forward.1} parent=11 // pred_check_branch
        %142 = sbr.rel (%p140) target = $region16
      $region15: #{net_forward.1} parent=11 // pred_region
        _
      $region16: #{net_forward.1} parent=11 // pred_fallthru
        _
      // Predicated region
      $region17: #{net_forward.1} parent=11 // pred_check
        %p143 = pneg %p78
      $region18: #{net_forward.1} parent=11 // pred_check_branch
        %145 = sbr.rel (%p143) target = $region20
      $region19: #{net_forward.1} parent=11 // pred_region
        _
      $region20: #{net_forward.1} parent=11 // pred_fallthru
        _
      // Predicated region
      $region21: #{net_forward.1} parent=11 // pred_check
        %p146 = pneg %p99
      $region22: #{net_forward.1} parent=11 // pred_check_branch
        %148 = sbr.rel (%p146) target = $region24
      $region23: #{net_forward.1} parent=11 // pred_region
        _
      $region24: #{net_forward.1} parent=11 // pred_fallthru
        _
    $region12: #{net_forward.1} parent=5 // pred_fallthru
      _
    %p149 = scmp.lt.s32.totalorder %s10, 2
    // Predicated region
    $region25: #{net_forward.1} parent=5 // pred_check
      %p150 = pneg %p149
    $region26: #{net_forward.1} parent=5 // pred_check_branch
      %152 = sbr.rel (%p150) target = $region28
    $region27: #{net_forward.1} parent=5 // pred_region
      // Predicated region
      $region29: #{net_forward.1} parent=27 // pred_check
        %p153 = pneg %p30
      $region30: #{net_forward.1} parent=27 // pred_check_branch
        %155 = sbr.rel (%p153) target = $region32
      $region31: #{net_forward.1} parent=27 // pred_region
        %p156 = scmp.lt.s32.totalorder %s10, 1
        %s157 = scalar_select %p156, %s10, 1
        %s158 = smul.addr %s157, 2
        %s159 = smul.addr %s158, 2
        %s160 = scalar_lea.vmem %s0, %s159
      $region32: #{net_forward.1} parent=27 // pred_fallthru
        _
    $region28: #{net_forward.1} parent=5 // pred_fallthru
      _
    %p161 = scmp.le.s32.totalorder 1, %s10
    %p162 = scmp.lt.s32.totalorder %s10, 3
    %p163 = pnand %p161, %p162
    %p164 = pneg %p163
    // Predicated region
    $region33: #{net_forward.1} parent=5 // pred_check
      _
    $region34: #{net_forward.1} parent=5 // pred_check_branch
      %166 = sbr.rel (%p163) target = $region36
    $region35: #{net_forward.1} parent=5 // pred_region
      %s167 = ssub.s32 %s10, 1
      %p168 = scmp.lt.s32.totalorder %s15, 1
      %s169 = scalar_select %p168, %s15, 1
      %s170 = smul.addr %s169, 2
      %s171 = smul.addr %s170, 2
      %s172 = scalar_lea.vmem %s0, %s171
      %p173 = pneg %p36
      %p174 = pneg %p33
      %p175 = pneg %p57
      %p176 = pneg %p54
      %p177 = pneg %p78
      %p178 = pneg %p75
      %p179 = pneg %p99
      %p180 = pneg %p96
      %p181 = pneg %p125
      %p182 = pneg %p122
      %p183 = scmp.lt.s32.totalorder %s15, 1
      %s184 = scalar_select %p183, %s15, 1
      %s185 = smul.addr %s184, 8
      %s186 = scalar_lea.vmem %s4, %s185
      %p187 = scmp.lt.s32.totalorder %s15, 1
      %s188 = scalar_select %p187, %s15, 1
      %s189 = smul.addr %s188, 2
      %s190 = smul.addr %s189, 2
      %s191 = scalar_lea.vmem %s0, %s190
      %p192 = scmp.lt.s32.totalorder %s15, 1
      %s193 = scalar_select %p192, %s15, 1
      %s194 = smul.addr %s193, 8
      %s195 = scalar_lea.vmem %s4, %s194
      %v197 = vld [vmem:[%s1] sm:$0xf]
      %v198 = vld [vmem:[%s2] sm:$0xff]
      %v199 = vld [vmem:[%s3] sm:$0xf]
      %v200 = vld [vmem:[%s3 + $0x4] sm:$0xf]
      %v201 = vld [vmem:[%s3 + $0x8] sm:$0xf]
      %v202 = vld [vmem:[%s3 + $0xc] sm:$0xf]
      %v203 = vld [vmem:[%s3 + $0x10] sm:$0xf]
      %v204 = vld [vmem:[%s3 + $0x14] sm:$0xf]
      %v205 = vld [vmem:[%s3 + $0x18] sm:$0xf]
      %v206 = vld [vmem:[%s3 + $0x1c] sm:$0xf]
      %v207 = vld [vmem:[%s3 + $0x20] sm:$0xf]
      %v208 = vld [vmem:[%s3 + $0x24] sm:$0xf]
      %v209 = vld [vmem:[%s3 + $0x28] sm:$0xf]
      %v210 = vld [vmem:[%s3 + $0x2c] sm:$0xf]
      %v211 = vld [vmem:[%s3 + $0x30] sm:$0xf]
      %v212 = vld [vmem:[%s3 + $0x34] sm:$0xf]
      %v213 = vld [vmem:[%s3 + $0x38] sm:$0xf]
      %v214 = vld [vmem:[%s3 + $0x3c] sm:$0xf]
      %v215 = vld [vmem:[%s3 + $0x40] sm:$0xf]
      %v216 = vld [vmem:[%s3 + $0x44] sm:$0xf]
      %v217 = vld [vmem:[%s3 + $0x48] sm:$0xf]
      %v218 = vld [vmem:[%s3 + $0x4c] sm:$0xf]
      %v219 = vld [vmem:[%s3 + $0x50] sm:$0xf]
      %v220 = vld [vmem:[%s3 + $0x54] sm:$0xf]
      %v221 = vld [vmem:[%s3 + $0x58] sm:$0xf]
      %v222 = vld [vmem:[%s3 + $0x5c] sm:$0xf]
      %v223 = vld [vmem:[%s3 + $0x60] sm:$0xf]
      %v224 = vld [vmem:[%s3 + $0x64] sm:$0xf]
      %v225 = vld [vmem:[%s3 + $0x68] sm:$0xf]
      %v226 = vld [vmem:[%s3 + $0x6c] sm:$0xf]
      %v227 = vld [vmem:[%s3 + $0x70] sm:$0xf]
      %v228 = vld [vmem:[%s3 + $0x74] sm:$0xf]
      %v229 = vld [vmem:[%s3 + $0x78] sm:$0xf]
      %v230 = vld [vmem:[%s3 + $0x7c] sm:$0xf]
      %v231 = vld [vmem:[%s3 + $0x80] sm:$0xf]
      %v232 = vld [vmem:[%s3 + $0x84] sm:$0x3]
      %233 = vst [vmem:[#allocation2] sm:$0x77] 0.0
      %vm234 = vcmask 550912
      %235 = vst.msk [vmem:[#allocation2 + $0x8] sm:$0x7] %vm234, 0.0
      %v236 = vld [vmem:[%s191] sm:$0x3]
      %v237 = vunpack.c.l.bf16 %v236
      %239 = vrot.lane.b32.xlu0 %v237, 19
      %v240 = vpop.permute.xlu0 %239
      %vm242 = vcmask 280728
      %243 = vst.msk [vmem:[#allocation2] sm:$0x7] %vm242, %v240
      %v244 = vld [vmem:[%s191] sm:$0x3]
      %v245 = vunpack.c.l.bf16 %v244
      %247 = vrot.lane.b32.xlu0 %v245, 21
      %v248 = vpop.permute.xlu0 %247
      %vm250 = vcmask 428328
      %251 = vst.msk [vmem:[#allocation2] sm:$0x7] %vm250, %v248
      %v252 = vld [vmem:[%s191] sm:$0x3]
      %v253 = vunpack.c.l.bf16 %v252
      %255 = vrot.lane.b32.xlu0 %v253, 23
      %v256 = vpop.permute.xlu0 %255
      %vm258 = vcmask 575928
      %259 = vst.msk [vmem:[#allocation2] sm:$0x7] %vm258, %v256
      %v260 = vld [vmem:[%s191] sm:$0x3]
      %v261 = vunpack.c.l.bf16 %v260
      %263 = vrot.lane.b32.xlu0 %v261, 25
      %v264 = vpop.permute.xlu0 %263
      %vm266 = vcmask 723528
      %267 = vst.msk [vmem:[#allocation2] sm:$0x7] %vm266, %v264
      %v268 = vld [vmem:[%s191] sm:$0x3]
      %v269 = vunpack.c.l.bf16 %v268
      %271 = vrot.lane.b32.xlu0 %v269, 27
      %v272 = vpop.permute.xlu0 %271
      %vm274 = vcmask 871128
      %275 = vst.msk [vmem:[#allocation2] sm:$0x7] %vm274, %v272
      %v276 = vld [vmem:[%s191] sm:$0x3]
      %v277 = vunpack.c.l.bf16 %v276
      %279 = vrot.lane.b32.xlu0 %v277, 29
      %v280 = vpop.permute.xlu0 %279
      %vm282 = vcmask 1018728
      %283 = vst.msk [vmem:[#allocation2] sm:$0x7] %vm282, %v280
      %v284 = vld [vmem:[%s191] sm:$0x3]
      %v285 = vunpack.c.l.bf16 %v284
      %287 = vrot.lane.b32.xlu0 %v285, 31
      %v288 = vpop.permute.xlu0 %287
      %v289 = vrot.slane %v288, 4
      %vm290 = vcmask 252928
      %v291 = vsel %vm290, %v289, %v288
      %vm293 = vcmask 1043448
      %vm294 = vcmask 120836
      %vm295 = vmor %vm294, %vm293
      %296 = vst.msk [vmem:[#allocation2] sm:$0x77] %vm295, %v291
      %v297 = vld [vmem:[%s191] sm:$0x3]
      %v298 = vunpack.c.l.bf16 %v297
      %300 = vrot.lane.b32.xlu0 %v298, 33
      %v301 = vpop.permute.xlu0 %300
      %vm303 = vcmask 264328
      %304 = vst.msk [vmem:[#allocation2 + $0x4] sm:$0x7] %vm303, %v301
      %v305 = vld [vmem:[%s191 + $0x2] sm:$0x3]
      %v306 = vunpack.c.l.bf16 %v305
      %308 = vrot.lane.b32.xlu0 %v306, 35
      %v309 = vpop.permute.xlu0 %308
      %vm311 = vcmask 411928
      %312 = vst.msk [vmem:[#allocation2 + $0x4] sm:$0x7] %vm311, %v309
      %v313 = vld [vmem:[%s191 + $0x2] sm:$0x3]
      %v314 = vunpack.c.l.bf16 %v313
      %316 = vrot.lane.b32.xlu0 %v314, 37
      %v317 = vpop.permute.xlu0 %316
      %vm319 = vcmask 559528
      %320 = vst.msk [vmem:[#allocation2 + $0x4] sm:$0x7] %vm319, %v317
      %v321 = vld [vmem:[%s191 + $0x2] sm:$0x3]
      %v322 = vunpack.c.l.bf16 %v321
      %324 = vrot.lane.b32.xlu0 %v322, 39
      %v325 = vpop.permute.xlu0 %324
      %vm327 = vcmask 707128
      %328 = vst.msk [vmem:[#allocation2 + $0x4] sm:$0x7] %vm327, %v325
      %v329 = vld [vmem:[%s191 + $0x2] sm:$0x3]
      %v330 = vunpack.c.l.bf16 %v329
      %332 = vrot.lane.b32.xlu0 %v330, 41
      %v333 = vpop.permute.xlu0 %332
      %vm335 = vcmask 854728
      %336 = vst.msk [vmem:[#allocation2 + $0x4] sm:$0x7] %vm335, %v333
      %v337 = vld [vmem:[%s191 + $0x2] sm:$0x3]
      %v338 = vunpack.c.l.bf16 %v337
      %340 = vrot.lane.b32.xlu0 %v338, 43
      %v341 = vpop.permute.xlu0 %340
      %vm343 = vcmask 1002328
      %344 = vst.msk [vmem:[#allocation2 + $0x4] sm:$0x7] %vm343, %v341
      %v345 = vld [vmem:[%s191 + $0x2] sm:$0x3]
      %v346 = vunpack.c.l.bf16 %v345
      %348 = vrot.lane.b32.xlu0 %v346, 45
      %v349 = vpop.permute.xlu0 %348
      %v350 = vrot.slane %v349, 4
      %vm351 = vcmask 367616
      %v352 = vsel %vm351, %v350, %v349
      %vm354 = vcmask 1043432
      %vm355 = vcmask 104452
      %vm356 = vmor %vm355, %vm354
      %357 = vst.msk [vmem:[#allocation2 + $0x4] sm:$0x77] %vm356, %v352
      %v358 = vld [vmem:[%s191 + $0x2] sm:$0x3]
      %v359 = vunpack.c.l.bf16 %v358
      %361 = vrot.lane.b32.xlu0 %v359, 47
      %v362 = vpop.permute.xlu0 %361
      %vm364 = vcmask 247928
      %365 = vst.msk [vmem:[#allocation2 + $0x8] sm:$0x7] %vm364, %v362
      %v366 = vld [vmem:[%s191 + $0x2] sm:$0x3]
      %v367 = vunpack.c.l.bf16 %v366
      %369 = vrot.lane.b32.xlu0 %v367, 49
      %v370 = vpop.permute.xlu0 %369
      %vm372 = vcmask 395528
      %373 = vst.msk [vmem:[#allocation2 + $0x8] sm:$0x7] %vm372, %v370
      %v374 = vld [vmem:[#allocation2] sm:$0x77]
      %v375 = vld [vmem:[#allocation2 + $0x8] sm:$0x7]
      %378 = vst [vmem:[#allocation1] ss:$2 sm:$0xff] %v374
      %s379 = scalar_lea.vmem [#allocation1], 16
      %380 = vst [vmem:[%s379] ss:$2 sm:$0xff] %v375
      %v381 = vld.sshfl [vmem:[#allocation1] sm:$0xff pattern:$0x75316420]
      %v382 = vld.sshfl [vmem:[#allocation1 + $0x8] sm:$0xff pattern:$0x75316420]
      %v383 = vld.sshfl [vmem:[#allocation1 + $0x10] sm:$0xff pattern:$0x75316420]
      %v387 = vpack.c.bf16 %v382, %v381
      %v388 = vpack.c.bf16 %v383, %v383
      %v390 = vunpack.c.l.b16 %v197
      %v391 = vpack.c.b16 %v390, %v390
      %392 = vrot.lane.b32.xlu0 %v391, 125
      %v393 = vpop.permute.xlu0 %392
      %v396 = vunpack.c.l.b16 %v387
      %v397 = vunpack.c.h.b16 %v387
      %v398 = vunpack.c.l.b16 %v388
      %v399 = vpack.c.b16 %v396, %v396
      %v400 = vpack.c.b16 %v397, %v397
      %v401 = vpack.c.b16 %v398, %v398
      %402 = vrot.lane.b32.xlu0 %v399, 127
      %v403 = vpop.permute.xlu0 %402
      %404 = vrot.lane.b32.xlu0 %v400, 127
      %v405 = vpop.permute.xlu0 %404
      %406 = vrot.lane.b32.xlu0 %v401, 127
      %v407 = vpop.permute.xlu0 %406
      %vm408 = vcmask 1039360
      %v409 = vsel %vm408, %v403, %v405
      %v410 = vsel %vm408, %v405, %v407
      %vm411 = vcmask 23552
      %v413 = vsel %vm411, %v393, 0
      %vm415 = vcmask 1040384
      %vm416 = vcmask 1041408
      %v417 = vsel %vm415, 4294967295, 65535
      %v418 = vsel %vm416, %v417, 0
      %v420 = vand.u32 %v409, %v418
      %v423 = vand.u32 %v410, %v418
      %v426 = vand.u32 %v407, %v418
      %428 = vmatpush.bf16.msra.mxu0 0
      %429 = vmatpush.bf16.msra.mxu0 0
      %430 = vmatpush.bf16.msra.mxu0 0
      %431 = vmatpush.bf16.msra.mxu0 0
      %432 = vmatpush.bf16.msra.mxu0 0
      %433 = vmatpush.bf16.msra.mxu0 0
      %434 = vmatpush.bf16.msra.mxu0 0
      %435 = vmatpush.bf16.msra.mxu0 %v420
      %436 = vmatmul.bf16.gmra.mxu0 %v413
      %v437 = vpop.f32.mrf.mxu0
      %v438 = vadd.f32 0.0, %v437
      %v439 = vpop.f32.mrf.mxu0
      %440 = vdwg.mxu0
      %441 = vmatpush.bf16.msra.mxu0 0
      %442 = vmatpush.bf16.msra.mxu0 0
      %443 = vmatpush.bf16.msra.mxu0 0
      %444 = vmatpush.bf16.msra.mxu0 0
      %445 = vmatpush.bf16.msra.mxu0 0
      %446 = vmatpush.bf16.msra.mxu0 0
      %447 = vmatpush.bf16.msra.mxu0 0
      %448 = vmatpush.bf16.msra.mxu0 %v423
      %449 = vmatmul.bf16.gmra.mxu0 %v413
      %v450 = vpop.f32.mrf.mxu0
      %v451 = vadd.f32 0.0, %v450
      %v452 = vpop.f32.mrf.mxu0
      %453 = vdwg.mxu0
      %454 = vmatpush.bf16.msra.mxu0 0
      %455 = vmatpush.bf16.msra.mxu0 0
      %456 = vmatpush.bf16.msra.mxu0 0
      %457 = vmatpush.bf16.msra.mxu0 0
      %458 = vmatpush.bf16.msra.mxu0 0
      %459 = vmatpush.bf16.msra.mxu0 0
      %460 = vmatpush.bf16.msra.mxu0 0
      %461 = vmatpush.bf16.msra.mxu0 %v426
      %462 = vmatmul.bf16.gmra.mxu0 %v413
      %v463 = vpop.f32.mrf.mxu0
      %v464 = vadd.f32 0.0, %v463
      %v465 = vpop.f32.mrf.mxu0
      %466 = vdwg.mxu0
      %v468 = vsel %vm411, %v197, 0
      %v471 = vand.u32 %v399, %v418
      %v474 = vand.u32 %v400, %v418
      %v477 = vand.u32 %v401, %v418
      %479 = vmatpush.bf16.msra.mxu0 0
      %480 = vmatpush.bf16.msra.mxu0 0
      %481 = vmatpush.bf16.msra.mxu0 0
      %482 = vmatpush.bf16.msra.mxu0 0
      %483 = vmatpush.bf16.msra.mxu0 0
      %484 = vmatpush.bf16.msra.mxu0 0
      %485 = vmatpush.bf16.msra.mxu0 0
      %486 = vmatpush.bf16.msra.mxu0 %v471
      %487 = vmatmul.bf16.gmra.mxu0 %v468
      %v488 = vpop.f32.mrf.mxu0
      %v489 = vadd.f32 %v438, %v488
      %v490 = vpop.f32.mrf.mxu0
      %491 = vdwg.mxu0
      %492 = vmatpush.bf16.msra.mxu0 0
      %493 = vmatpush.bf16.msra.mxu0 0
      %494 = vmatpush.bf16.msra.mxu0 0
      %495 = vmatpush.bf16.msra.mxu0 0
      %496 = vmatpush.bf16.msra.mxu0 0
      %497 = vmatpush.bf16.msra.mxu0 0
      %498 = vmatpush.bf16.msra.mxu0 0
      %499 = vmatpush.bf16.msra.mxu0 %v474
      %500 = vmatmul.bf16.gmra.mxu0 %v468
      %v501 = vpop.f32.mrf.mxu0
      %v502 = vadd.f32 %v451, %v501
      %v503 = vpop.f32.mrf.mxu0
      %504 = vdwg.mxu0
      %505 = vmatpush.bf16.msra.mxu0 0
      %506 = vmatpush.bf16.msra.mxu0 0
      %507 = vmatpush.bf16.msra.mxu0 0
      %508 = vmatpush.bf16.msra.mxu0 0
      %509 = vmatpush.bf16.msra.mxu0 0
      %510 = vmatpush.bf16.msra.mxu0 0
      %511 = vmatpush.bf16.msra.mxu0 0
      %512 = vmatpush.bf16.msra.mxu0 %v477
      %513 = vmatmul.bf16.gmra.mxu0 %v468
      %v514 = vpop.f32.mrf.mxu0
      %v515 = vadd.f32 %v464, %v514
      %v516 = vpop.f32.mrf.mxu0
      %517 = vdwg.mxu0
      %518 = vrot.lane.b32.xlu0 %v391, 122
      %v519 = vpop.permute.xlu0 %518
      %520 = vrot.lane.b32.xlu0 %v399, 126
      %v521 = vpop.permute.xlu0 %520
      %522 = vrot.lane.b32.xlu0 %v400, 126
      %v523 = vpop.permute.xlu0 %522
      %524 = vrot.lane.b32.xlu0 %v401, 126
      %v525 = vpop.permute.xlu0 %524
      %vm526 = vcmask 1031168
      %v527 = vsel %vm526, %v521, %v523
      %v528 = vsel %vm526, %v523, %v525
      %v530 = vsel %vm411, %v519, 0
      %v533 = vand.u32 %v527, %v418
      %v536 = vand.u32 %v528, %v418
      %v539 = vand.u32 %v525, %v418
      %541 = vmatpush.bf16.msra.mxu0 0
      %542 = vmatpush.bf16.msra.mxu0 0
      %543 = vmatpush.bf16.msra.mxu0 0
      %544 = vmatpush.bf16.msra.mxu0 0
      %545 = vmatpush.bf16.msra.mxu0 0
      %546 = vmatpush.bf16.msra.mxu0 0
      %547 = vmatpush.bf16.msra.mxu0 0
      %548 = vmatpush.bf16.msra.mxu0 %v533
      %549 = vmatmul.bf16.gmra.mxu0 %v530
      %v550 = vpop.f32.mrf.mxu0
      %v551 = vadd.f32 0.0, %v550
      %v552 = vpop.f32.mrf.mxu0
      %553 = vdwg.mxu0
      %554 = vmatpush.bf16.msra.mxu0 0
      %555 = vmatpush.bf16.msra.mxu0 0
      %556 = vmatpush.bf16.msra.mxu0 0
      %557 = vmatpush.bf16.msra.mxu0 0
      %558 = vmatpush.bf16.msra.mxu0 0
      %559 = vmatpush.bf16.msra.mxu0 0
      %560 = vmatpush.bf16.msra.mxu0 0
      %561 = vmatpush.bf16.msra.mxu0 %v536
      %562 = vmatmul.bf16.gmra.mxu0 %v530
      %v563 = vpop.f32.mrf.mxu0
      %v564 = vadd.f32 0.0, %v563
      %v565 = vpop.f32.mrf.mxu0
      %566 = vdwg.mxu0
      %567 = vmatpush.bf16.msra.mxu0 0
      %568 = vmatpush.bf16.msra.mxu0 0
      %569 = vmatpush.bf16.msra.mxu0 0
      %570 = vmatpush.bf16.msra.mxu0 0
      %571 = vmatpush.bf16.msra.mxu0 0
      %572 = vmatpush.bf16.msra.mxu0 0
      %573 = vmatpush.bf16.msra.mxu0 0
      %574 = vmatpush.bf16.msra.mxu0 %v539
      %575 = vmatmul.bf16.gmra.mxu0 %v530
      %v576 = vpop.f32.mrf.mxu0
      %v577 = vadd.f32 0.0, %v576
      %v578 = vpop.f32.mrf.mxu0
      %579 = vdwg.mxu0
      %v580 = vadd.f32 %v489, %v551
      %v581 = vadd.f32 %v502, %v564
      %v582 = vadd.f32 %v515, %v577
      %583 = vrot.lane.b32.xlu0 %v391, 119
      %v584 = vpop.permute.xlu0 %583
      %585 = vrot.lane.b32.xlu0 %v399, 110
      %v586 = vpop.permute.xlu0 %585
      %587 = vrot.lane.b32.xlu0 %v400, 110
      %v588 = vpop.permute.xlu0 %587
      %589 = vrot.lane.b32.xlu0 %v401, 110
      %v590 = vpop.permute.xlu0 %589
      %vm591 = vcmask 900096
      %v592 = vsel %vm591, %v586, %v588
      %v593 = vsel %vm591, %v588, %v590
      %v595 = vsel %vm411, %v584, 0
      %v598 = vand.u32 %v592, %v418
      %v601 = vand.u32 %v593, %v418
      %v604 = vand.u32 %v590, %v418
      %606 = vmatpush.bf16.msra.mxu0 0
      %607 = vmatpush.bf16.msra.mxu0 0
      %608 = vmatpush.bf16.msra.mxu0 0
      %609 = vmatpush.bf16.msra.mxu0 0
      %610 = vmatpush.bf16.msra.mxu0 0
      %611 = vmatpush.bf16.msra.mxu0 0
      %612 = vmatpush.bf16.msra.mxu0 0
      %613 = vmatpush.bf16.msra.mxu0 %v598
      %614 = vmatmul.bf16.gmra.mxu0 %v595
      %v615 = vpop.f32.mrf.mxu0
      %v616 = vadd.f32 0.0, %v615
      %v617 = vpop.f32.mrf.mxu0
      %618 = vdwg.mxu0
      %619 = vmatpush.bf16.msra.mxu0 0
      %620 = vmatpush.bf16.msra.mxu0 0
      %621 = vmatpush.bf16.msra.mxu0 0
      %622 = vmatpush.bf16.msra.mxu0 0
      %623 = vmatpush.bf16.msra.mxu0 0
      %624 = vmatpush.bf16.msra.mxu0 0
      %625 = vmatpush.bf16.msra.mxu0 0
      %626 = vmatpush.bf16.msra.mxu0 %v601
      %627 = vmatmul.bf16.gmra.mxu0 %v595
      %v628 = vpop.f32.mrf.mxu0
      %v629 = vadd.f32 0.0, %v628
      %v630 = vpop.f32.mrf.mxu0
      %631 = vdwg.mxu0
      %632 = vmatpush.bf16.msra.mxu0 0
      %633 = vmatpush.bf16.msra.mxu0 0
      %634 = vmatpush.bf16.msra.mxu0 0
      %635 = vmatpush.bf16.msra.mxu0 0
      %636 = vmatpush.bf16.msra.mxu0 0
      %637 = vmatpush.bf16.msra.mxu0 0
      %638 = vmatpush.bf16.msra.mxu0 0
      %639 = vmatpush.bf16.msra.mxu0 %v604
      %640 = vmatmul.bf16.gmra.mxu0 %v595
      %v641 = vpop.f32.mrf.mxu0
      %v642 = vadd.f32 0.0, %v641
      %v643 = vpop.f32.mrf.mxu0
      %644 = vdwg.mxu0
      %v645 = vadd.f32 %v580, %v616
      %v646 = vadd.f32 %v581, %v629
      %v647 = vadd.f32 %v582, %v642
      %648 = vrot.lane.b32.xlu0 %v391, 116
      %v649 = vpop.permute.xlu0 %648
      %650 = vrot.lane.b32.xlu0 %v399, 109
      %v651 = vpop.permute.xlu0 %650
      %652 = vrot.lane.b32.xlu0 %v400, 109
      %v653 = vpop.permute.xlu0 %652
      %654 = vrot.lane.b32.xlu0 %v401, 109
      %v655 = vpop.permute.xlu0 %654
      %vm656 = vcmask 891904
      %v657 = vsel %vm656, %v651, %v653
      %v658 = vsel %vm656, %v653, %v655
      %v660 = vsel %vm411, %v649, 0
      %v663 = vand.u32 %v657, %v418
      %v666 = vand.u32 %v658, %v418
      %v669 = vand.u32 %v655, %v418
      %671 = vmatpush.bf16.msra.mxu0 0
      %672 = vmatpush.bf16.msra.mxu0 0
      %673 = vmatpush.bf16.msra.mxu0 0
      %674 = vmatpush.bf16.msra.mxu0 0
      %675 = vmatpush.bf16.msra.mxu0 0
      %676 = vmatpush.bf16.msra.mxu0 0
      %677 = vmatpush.bf16.msra.mxu0 0
      %678 = vmatpush.bf16.msra.mxu0 %v663
      %679 = vmatmul.bf16.gmra.mxu0 %v660
      %v680 = vpop.f32.mrf.mxu0
      %v681 = vadd.f32 0.0, %v680
      %v682 = vpop.f32.mrf.mxu0
      %683 = vdwg.mxu0
      %684 = vmatpush.bf16.msra.mxu0 0
      %685 = vmatpush.bf16.msra.mxu0 0
      %686 = vmatpush.bf16.msra.mxu0 0
      %687 = vmatpush.bf16.msra.mxu0 0
      %688 = vmatpush.bf16.msra.mxu0 0
      %689 = vmatpush.bf16.msra.mxu0 0
      %690 = vmatpush.bf16.msra.mxu0 0
      %691 = vmatpush.bf16.msra.mxu0 %v666
      %692 = vmatmul.bf16.gmra.mxu0 %v660
      %v693 = vpop.f32.mrf.mxu0
      %v694 = vadd.f32 0.0, %v693
      %v695 = vpop.f32.mrf.mxu0
      %696 = vdwg.mxu0
      %697 = vmatpush.bf16.msra.mxu0 0
      %698 = vmatpush.bf16.msra.mxu0 0
      %699 = vmatpush.bf16.msra.mxu0 0
      %700 = vmatpush.bf16.msra.mxu0 0
      %701 = vmatpush.bf16.msra.mxu0 0
      %702 = vmatpush.bf16.msra.mxu0 0
      %703 = vmatpush.bf16.msra.mxu0 0
      %704 = vmatpush.bf16.msra.mxu0 %v669
      %705 = vmatmul.bf16.gmra.mxu0 %v660
      %v706 = vpop.f32.mrf.mxu0
      %v707 = vadd.f32 0.0, %v706
      %v708 = vpop.f32.mrf.mxu0
      %709 = vdwg.mxu0
      %v710 = vadd.f32 %v645, %v681
      %v711 = vadd.f32 %v646, %v694
      %v712 = vadd.f32 %v647, %v707
      %713 = vrot.lane.b32.xlu0 %v391, 113
      %v714 = vpop.permute.xlu0 %713
      %715 = vrot.lane.b32.xlu0 %v399, 108
      %v716 = vpop.permute.xlu0 %715
      %717 = vrot.lane.b32.xlu0 %v400, 108
      %v718 = vpop.permute.xlu0 %717
      %719 = vrot.lane.b32.xlu0 %v401, 108
      %v720 = vpop.permute.xlu0 %719
      %vm721 = vcmask 883712
      %v722 = vsel %vm721, %v716, %v718
      %v723 = vsel %vm721, %v718, %v720
      %v725 = vsel %vm411, %v714, 0
      %v728 = vand.u32 %v722, %v418
      %v731 = vand.u32 %v723, %v418
      %v734 = vand.u32 %v720, %v418
      %736 = vmatpush.bf16.msra.mxu0 0
      %737 = vmatpush.bf16.msra.mxu0 0
      %738 = vmatpush.bf16.msra.mxu0 0
      %739 = vmatpush.bf16.msra.mxu0 0
      %740 = vmatpush.bf16.msra.mxu0 0
      %741 = vmatpush.bf16.msra.mxu0 0
      %742 = vmatpush.bf16.msra.mxu0 0
      %743 = vmatpush.bf16.msra.mxu0 %v728
      %744 = vmatmul.bf16.gmra.mxu0 %v725
      %v745 = vpop.f32.mrf.mxu0
      %v746 = vadd.f32 0.0, %v745
      %v747 = vpop.f32.mrf.mxu0
      %748 = vdwg.mxu0
      %749 = vmatpush.bf16.msra.mxu0 0
      %750 = vmatpush.bf16.msra.mxu0 0
      %751 = vmatpush.bf16.msra.mxu0 0
      %752 = vmatpush.bf16.msra.mxu0 0
      %753 = vmatpush.bf16.msra.mxu0 0
      %754 = vmatpush.bf16.msra.mxu0 0
      %755 = vmatpush.bf16.msra.mxu0 0
      %756 = vmatpush.bf16.msra.mxu0 %v731
      %757 = vmatmul.bf16.gmra.mxu0 %v725
      %v758 = vpop.f32.mrf.mxu0
      %v759 = vadd.f32 0.0, %v758
      %v760 = vpop.f32.mrf.mxu0
      %761 = vdwg.mxu0
      %762 = vmatpush.bf16.msra.mxu0 0
      %763 = vmatpush.bf16.msra.mxu0 0
      %764 = vmatpush.bf16.msra.mxu0 0
      %765 = vmatpush.bf16.msra.mxu0 0
      %766 = vmatpush.bf16.msra.mxu0 0
      %767 = vmatpush.bf16.msra.mxu0 0
      %768 = vmatpush.bf16.msra.mxu0 0
      %769 = vmatpush.bf16.msra.mxu0 %v734
      %770 = vmatmul.bf16.gmra.mxu0 %v725
      %v771 = vpop.f32.mrf.mxu0
      %v772 = vadd.f32 0.0, %v771
      %v773 = vpop.f32.mrf.mxu0
      %774 = vdwg.mxu0
      %v775 = vadd.f32 %v710, %v746
      %v776 = vadd.f32 %v711, %v759
      %v777 = vadd.f32 %v712, %v772
      %778 = vrot.lane.b32.xlu0 %v391, 110
      %v779 = vpop.permute.xlu0 %778
      %780 = vrot.lane.b32.xlu0 %v399, 92
      %v781 = vpop.permute.xlu0 %780
      %782 = vrot.lane.b32.xlu0 %v400, 92
      %v783 = vpop.permute.xlu0 %782
      %784 = vrot.lane.b32.xlu0 %v401, 92
      %v785 = vpop.permute.xlu0 %784
      %vm786 = vcmask 752640
      %v787 = vsel %vm786, %v781, %v783
      %v788 = vsel %vm786, %v783, %v785
      %v790 = vsel %vm411, %v779, 0
      %v793 = vand.u32 %v787, %v418
      %v796 = vand.u32 %v788, %v418
      %v799 = vand.u32 %v785, %v418
      %801 = vmatpush.bf16.msra.mxu0 0
      %802 = vmatpush.bf16.msra.mxu0 0
      %803 = vmatpush.bf16.msra.mxu0 0
      %804 = vmatpush.bf16.msra.mxu0 0
      %805 = vmatpush.bf16.msra.mxu0 0
      %806 = vmatpush.bf16.msra.mxu0 0
      %807 = vmatpush.bf16.msra.mxu0 0
      %808 = vmatpush.bf16.msra.mxu0 %v793
      %809 = vmatmul.bf16.gmra.mxu0 %v790
      %v810 = vpop.f32.mrf.mxu0
      %v811 = vadd.f32 0.0, %v810
      %v812 = vpop.f32.mrf.mxu0
      %813 = vdwg.mxu0
      %814 = vmatpush.bf16.msra.mxu0 0
      %815 = vmatpush.bf16.msra.mxu0 0
      %816 = vmatpush.bf16.msra.mxu0 0
      %817 = vmatpush.bf16.msra.mxu0 0
      %818 = vmatpush.bf16.msra.mxu0 0
      %819 = vmatpush.bf16.msra.mxu0 0
      %820 = vmatpush.bf16.msra.mxu0 0
      %821 = vmatpush.bf16.msra.mxu0 %v796
      %822 = vmatmul.bf16.gmra.mxu0 %v790
      %v823 = vpop.f32.mrf.mxu0
      %v824 = vadd.f32 0.0, %v823
      %v825 = vpop.f32.mrf.mxu0
      %826 = vdwg.mxu0
      %827 = vmatpush.bf16.msra.mxu0 0
      %828 = vmatpush.bf16.msra.mxu0 0
      %829 = vmatpush.bf16.msra.mxu0 0
      %830 = vmatpush.bf16.msra.mxu0 0
      %831 = vmatpush.bf16.msra.mxu0 0
      %832 = vmatpush.bf16.msra.mxu0 0
      %833 = vmatpush.bf16.msra.mxu0 0
      %834 = vmatpush.bf16.msra.mxu0 %v799
      %835 = vmatmul.bf16.gmra.mxu0 %v790
      %v836 = vpop.f32.mrf.mxu0
      %v837 = vadd.f32 0.0, %v836
      %v838 = vpop.f32.mrf.mxu0
      %839 = vdwg.mxu0
      %v840 = vadd.f32 %v775, %v811
      %v841 = vadd.f32 %v776, %v824
      %v842 = vadd.f32 %v777, %v837
      %843 = vrot.lane.b32.xlu0 %v391, 107
      %v844 = vpop.permute.xlu0 %843
      %845 = vrot.lane.b32.xlu0 %v399, 91
      %v846 = vpop.permute.xlu0 %845
      %847 = vrot.lane.b32.xlu0 %v400, 91
      %v848 = vpop.permute.xlu0 %847
      %849 = vrot.lane.b32.xlu0 %v401, 91
      %v850 = vpop.permute.xlu0 %849
      %vm851 = vcmask 744448
      %v852 = vsel %vm851, %v846, %v848
      %v853 = vsel %vm851, %v848, %v850
      %v855 = vsel %vm411, %v844, 0
      %v858 = vand.u32 %v852, %v418
      %v861 = vand.u32 %v853, %v418
      %v864 = vand.u32 %v850, %v418
      %866 = vmatpush.bf16.msra.mxu0 0
      %867 = vmatpush.bf16.msra.mxu0 0
      %868 = vmatpush.bf16.msra.mxu0 0
      %869 = vmatpush.bf16.msra.mxu0 0
      %870 = vmatpush.bf16.msra.mxu0 0
      %871 = vmatpush.bf16.msra.mxu0 0
      %872 = vmatpush.bf16.msra.mxu0 0
      %873 = vmatpush.bf16.msra.mxu0 %v858
      %874 = vmatmul.bf16.gmra.mxu0 %v855
      %v875 = vpop.f32.mrf.mxu0
      %v876 = vadd.f32 0.0, %v875
      %v877 = vpop.f32.mrf.mxu0
      %878 = vdwg.mxu0
      %879 = vmatpush.bf16.msra.mxu0 0
      %880 = vmatpush.bf16.msra.mxu0 0
      %881 = vmatpush.bf16.msra.mxu0 0
      %882 = vmatpush.bf16.msra.mxu0 0
      %883 = vmatpush.bf16.msra.mxu0 0
      %884 = vmatpush.bf16.msra.mxu0 0
      %885 = vmatpush.bf16.msra.mxu0 0
      %886 = vmatpush.bf16.msra.mxu0 %v861
      %887 = vmatmul.bf16.gmra.mxu0 %v855
      %v888 = vpop.f32.mrf.mxu0
      %v889 = vadd.f32 0.0, %v888
      %v890 = vpop.f32.mrf.mxu0
      %891 = vdwg.mxu0
      %892 = vmatpush.bf16.msra.mxu0 0
      %893 = vmatpush.bf16.msra.mxu0 0
      %894 = vmatpush.bf16.msra.mxu0 0
      %895 = vmatpush.bf16.msra.mxu0 0
      %896 = vmatpush.bf16.msra.mxu0 0
      %897 = vmatpush.bf16.msra.mxu0 0
      %898 = vmatpush.bf16.msra.mxu0 0
      %899 = vmatpush.bf16.msra.mxu0 %v864
      %900 = vmatmul.bf16.gmra.mxu0 %v855
      %v901 = vpop.f32.mrf.mxu0
      %v902 = vadd.f32 0.0, %v901
      %v903 = vpop.f32.mrf.mxu0
      %904 = vdwg.mxu0
      %v905 = vadd.f32 %v840, %v876
      %v906 = vadd.f32 %v841, %v889
      %v907 = vadd.f32 %v842, %v902
      %908 = vrot.lane.b32.xlu0 %v391, 104
      %v909 = vpop.permute.xlu0 %908
      %910 = vrot.lane.b32.xlu0 %v399, 90
      %v911 = vpop.permute.xlu0 %910
      %912 = vrot.lane.b32.xlu0 %v400, 90
      %v913 = vpop.permute.xlu0 %912
      %914 = vrot.lane.b32.xlu0 %v401, 90
      %v915 = vpop.permute.xlu0 %914
      %vm916 = vcmask 736256
      %v917 = vsel %vm916, %v911, %v913
      %v918 = vsel %vm916, %v913, %v915
      %v920 = vsel %vm411, %v909, 0
      %v923 = vand.u32 %v917, %v418
      %v926 = vand.u32 %v918, %v418
      %v929 = vand.u32 %v915, %v418
      %931 = vmatpush.bf16.msra.mxu0 0
      %932 = vmatpush.bf16.msra.mxu0 0
      %933 = vmatpush.bf16.msra.mxu0 0
      %934 = vmatpush.bf16.msra.mxu0 0
      %935 = vmatpush.bf16.msra.mxu0 0
      %936 = vmatpush.bf16.msra.mxu0 0
      %937 = vmatpush.bf16.msra.mxu0 0
      %938 = vmatpush.bf16.msra.mxu0 %v923
      %939 = vmatmul.bf16.gmra.mxu0 %v920
      %v940 = vpop.f32.mrf.mxu0
      %v941 = vadd.f32 0.0, %v940
      %v942 = vpop.f32.mrf.mxu0
      %943 = vdwg.mxu0
      %944 = vmatpush.bf16.msra.mxu0 0
      %945 = vmatpush.bf16.msra.mxu0 0
      %946 = vmatpush.bf16.msra.mxu0 0
      %947 = vmatpush.bf16.msra.mxu0 0
      %948 = vmatpush.bf16.msra.mxu0 0
      %949 = vmatpush.bf16.msra.mxu0 0
      %950 = vmatpush.bf16.msra.mxu0 0
      %951 = vmatpush.bf16.msra.mxu0 %v926
      %952 = vmatmul.bf16.gmra.mxu0 %v920
      %v953 = vpop.f32.mrf.mxu0
      %v954 = vadd.f32 0.0, %v953
      %v955 = vpop.f32.mrf.mxu0
      %956 = vdwg.mxu0
      %957 = vmatpush.bf16.msra.mxu0 0
      %958 = vmatpush.bf16.msra.mxu0 0
      %959 = vmatpush.bf16.msra.mxu0 0
      %960 = vmatpush.bf16.msra.mxu0 0
      %961 = vmatpush.bf16.msra.mxu0 0
      %962 = vmatpush.bf16.msra.mxu0 0
      %963 = vmatpush.bf16.msra.mxu0 0
      %964 = vmatpush.bf16.msra.mxu0 %v929
      %965 = vmatmul.bf16.gmra.mxu0 %v920
      %v966 = vpop.f32.mrf.mxu0
      %v967 = vadd.f32 0.0, %v966
      %v968 = vpop.f32.mrf.mxu0
      %969 = vdwg.mxu0
      %v970 = vadd.f32 %v905, %v941
      %v971 = vadd.f32 %v906, %v954
      %v972 = vadd.f32 %v907, %v967
      %974 = vset.pattern.permute.xlu0 0
      %975 = vperm.xlu0 %974, %v198
      %v976 = vpop.permute.xlu0 %975
      %v978 = vadd.f32 %v970, %v976
      %v979 = vadd.f32 %v971, %v976
      %v980 = vadd.f32 %v972, %v976
      %v981 = vmax.f32 %v978, 0.0
      %v982 = vmax.f32 %v979, 0.0
      %v983 = vmax.f32 %v980, 0.0
      %987 = vrot.lane.b32.xlu0 %v981, 127
      %v988 = vpop.permute.xlu0 %987
      %989 = vrot.lane.b32.xlu0 %v982, 127
      %v990 = vpop.permute.xlu0 %989
      %991 = vrot.lane.b32.xlu0 %v983, 127
      %v992 = vpop.permute.xlu0 %991
      %vm993 = vcmask 1039360
      %v994 = vsel %vm993, %v988, %v990
      %v995 = vsel %vm993, %v990, %v992
      %v999 = vmax.f32 %v981, %v994
      %v1000 = vmax.f32 %v982, %v995
      %v1001 = vmax.f32 %v983, %v992
      %1005 = vrot.lane.b32.xlu0 %v999, 110
      %v1006 = vpop.permute.xlu0 %1005
      %1007 = vrot.lane.b32.xlu0 %v1000, 110
      %v1008 = vpop.permute.xlu0 %1007
      %1009 = vrot.lane.b32.xlu0 %v1001, 110
      %v1010 = vpop.permute.xlu0 %1009
      %vm1011 = vcmask 900096
      %v1012 = vsel %vm1011, %v1006, %v1008
      %v1013 = vsel %vm1011, %v1008, %v1010
      %v1017 = vmax.f32 %v999, %v1012
      %v1018 = vmax.f32 %v1000, %v1013
      %v1019 = vmax.f32 %v1001, %v1010
      %v1020 = vpack.c.bf16 %v1017, %v1017
      %v1021 = vpack.c.bf16 %v1018, %v1018
      %v1022 = vpack.c.bf16 %v1019, %v1019
      %v1057 = vunpack.c.l.b16 %v199
      %v1058 = vunpack.c.l.b16 %v200
      %v1059 = vunpack.c.l.b16 %v201
      %v1060 = vunpack.c.l.b16 %v202
      %v1061 = vunpack.c.l.b16 %v203
      %v1062 = vunpack.c.l.b16 %v204
      %v1063 = vunpack.c.l.b16 %v205
      %v1064 = vunpack.c.l.b16 %v206
      %v1065 = vunpack.c.l.b16 %v207
      %v1066 = vunpack.c.l.b16 %v208
      %v1067 = vunpack.c.l.b16 %v209
      %v1068 = vunpack.c.l.b16 %v210
      %v1069 = vunpack.c.l.b16 %v211
      %v1070 = vunpack.c.l.b16 %v212
      %v1071 = vunpack.c.l.b16 %v213
      %v1072 = vunpack.c.l.b16 %v214
      %v1073 = vunpack.c.l.b16 %v215
      %v1074 = vunpack.c.l.b16 %v216
      %v1075 = vunpack.c.l.b16 %v217
      %v1076 = vunpack.c.l.b16 %v218
      %v1077 = vunpack.c.l.b16 %v219
      %v1078 = vunpack.c.l.b16 %v220
      %v1079 = vunpack.c.l.b16 %v221
      %v1080 = vunpack.c.l.b16 %v222
      %v1081 = vunpack.c.l.b16 %v223
      %v1082 = vunpack.c.l.b16 %v224
      %v1083 = vunpack.c.l.b16 %v225
      %v1084 = vunpack.c.l.b16 %v226
      %v1085 = vunpack.c.l.b16 %v227
      %v1086 = vunpack.c.l.b16 %v228
      %v1087 = vunpack.c.l.b16 %v229
      %v1088 = vunpack.c.l.b16 %v230
      %v1089 = vunpack.c.l.b16 %v231
      %v1090 = vunpack.c.l.b16 %v232
      %v1091 = vpack.c.b16 %v1058, %v1057
      %v1092 = vpack.c.b16 %v1060, %v1059
      %v1093 = vpack.c.b16 %v1062, %v1061
      %v1094 = vpack.c.b16 %v1064, %v1063
      %v1095 = vpack.c.b16 %v1066, %v1065
      %v1096 = vpack.c.b16 %v1068, %v1067
      %v1097 = vpack.c.b16 %v1070, %v1069
      %v1098 = vpack.c.b16 %v1072, %v1071
      %v1099 = vpack.c.b16 %v1074, %v1073
      %v1100 = vpack.c.b16 %v1076, %v1075
      %v1101 = vpack.c.b16 %v1078, %v1077
      %v1102 = vpack.c.b16 %v1080, %v1079
      %v1103 = vpack.c.b16 %v1082, %v1081
      %v1104 = vpack.c.b16 %v1084, %v1083
      %v1105 = vpack.c.b16 %v1086, %v1085
      %v1106 = vpack.c.b16 %v1088, %v1087
      %v1107 = vpack.c.b16 %v1090, %v1089
      %vm1124 = vcmask 89088
      %v1126 = vsel %vm1124, %v1022, 0
      %vm1128 = vcmask 1044480
      %vm1129 = vcmask 1045504
      %v1130 = vsel %vm1128, 4294967295, 65535
      %v1131 = vsel %vm1129, %v1130, 0
      %v1133 = vand.u32 %v1107, %v1131
      %1135 = vmatpush.bf16.msra.mxu0 %v1098
      %1136 = vmatpush.bf16.msra.mxu0 %v1097
      %1137 = vmatpush.bf16.msra.mxu0 %v1096
      %1138 = vmatpush.bf16.msra.mxu0 %v1095
      %1139 = vmatpush.bf16.msra.mxu0 %v1094
      %1140 = vmatpush.bf16.msra.mxu0 %v1093
      %1141 = vmatpush.bf16.msra.mxu0 %v1092
      %1142 = vmatpush.bf16.msra.mxu0 %v1091
      %1143 = vmatmul.bf16.gmra.mxu0 %v1020
      %v1144 = vpop.f32.mrf.mxu0
      %v1145 = vadd.f32 0.0, %v1144
      %v1146 = vpop.f32.mrf.mxu0
      %1147 = vdwg.mxu0
      %1148 = vmatpush.bf16.msra.mxu0 %v1106
      %1149 = vmatpush.bf16.msra.mxu0 %v1105
      %1150 = vmatpush.bf16.msra.mxu0 %v1104
      %1151 = vmatpush.bf16.msra.mxu0 %v1103
      %1152 = vmatpush.bf16.msra.mxu0 %v1102
      %1153 = vmatpush.bf16.msra.mxu0 %v1101
      %1154 = vmatpush.bf16.msra.mxu0 %v1100
      %1155 = vmatpush.bf16.msra.mxu0 %v1099
      %1156 = vmatmul.bf16.gmra.mxu0 %v1021
      %v1157 = vpop.f32.mrf.mxu0
      %v1158 = vadd.f32 %v1145, %v1157
      %v1159 = vpop.f32.mrf.mxu0
      %1160 = vdwg.mxu0
      %1161 = vmatpush.bf16.msra.mxu0 0
      %1162 = vmatpush.bf16.msra.mxu0 0
      %1163 = vmatpush.bf16.msra.mxu0 0
      %1164 = vmatpush.bf16.msra.mxu0 0
      %1165 = vmatpush.bf16.msra.mxu0 0
      %1166 = vmatpush.bf16.msra.mxu0 0
      %1167 = vmatpush.bf16.msra.mxu0 0
      %1168 = vmatpush.bf16.msra.mxu0 %v1133
      %1169 = vmatmul.bf16.gmra.mxu0 %v1126
      %v1170 = vpop.f32.mrf.mxu0
      %v1171 = vadd.f32 %v1158, %v1170
      %v1172 = vpop.f32.mrf.mxu0
      %1173 = vdwg.mxu0
      %vm1174 = vcmask 523264
      %1175 = vst.msk [vmem:[%s195] sm:$0xff] %vm1174, %v1171
      %p1176 = scmp.lt.s32.totalorder %s15, 1
      %s1177 = scalar_select %p1176, %s15, 1
      %s1178 = smul.addr %s1177, 8
      %s1179 = scalar_lea.vmem %s4, %s1178
      // Predicated region
      $region37: #{net_forward.1} parent=35 // pred_check
        %p1180 = pneg %p122
      $region38: #{net_forward.1} parent=35 // pred_check_branch
        %1182 = sbr.rel (%p1180) target = $region40
      $region39: #{net_forward.1} parent=35 // pred_region
        _
      $region40: #{net_forward.1} parent=35 // pred_fallthru
        _
    $region36: #{net_forward.1} parent=5 // pred_fallthru
      _
    %p1183 = scmp.le.s32.totalorder 2, %s10
    // Predicated region
    $region41: #{net_forward.1} parent=5 // pred_check
      %p1184 = pneg %p1183
    $region42: #{net_forward.1} parent=5 // pred_check_branch
      %1186 = sbr.rel (%p1184) target = $region44
    $region43: #{net_forward.1} parent=5 // pred_region
      %s1187 = ssub.s32 %s10, 2
      // Predicated region
      $region45: #{net_forward.1} parent=43 // pred_check
        %p1188 = pneg %p128
      $region46: #{net_forward.1} parent=43 // pred_check_branch
        %1190 = sbr.rel (%p1188) target = $region48
      $region47: #{net_forward.1} parent=43 // pred_region
        %p1191 = scmp.lt.s32.totalorder %s16, 1
        %s1192 = scalar_select %p1191, %s16, 1
        %s1193 = smul.addr %s1192, 8
        %s1194 = scalar_lea.vmem %s4, %s1193
      $region48: #{net_forward.1} parent=43 // pred_fallthru
        _
    $region44: #{net_forward.1} parent=5 // pred_fallthru
      _
  $region6: #{net_forward.1} parent=0 // loop_footer
    %s14 = sadd.s32 1, %s10
  $region7: #{net_forward.1} parent=0 // loop_footer_branch
    %9 = sbr.rel target = $region3
  $region8: #{net_forward.1} parent=0 // loop_exit
    _

</llo_original>
